<compile_context>
chip_gen: v7x
topology: tpu7x:2x2x1
jax: 0.10.0
libtpu: 0.0.40
codegen_flags: <defaults>
</compile_context>

<pallas_src>
import functools

import jax
import jax.numpy as jnp
from jax.experimental import pallas as pl
from jax.experimental.pallas import tpu as pltpu


def _round_up(n, m):
    return ((n + m - 1) // m) * m


def _mlp_policy_kernel(x_ref, *refs, num_layers):
    """Fused MLP + softmax over one batch tile. refs = (w1, b1, ..., wn, bn, out)."""
    out_ref = refs[-1]
    param_refs = refs[:-1]

    h = x_ref[...]                                        # (TB, D_in), compute dtype
    logits = None
    for layer in range(num_layers):
        w_ref = param_refs[2 * layer]
        b_ref = param_refs[2 * layer + 1]
        z = jnp.dot(h, w_ref[...], preferred_element_type=jnp.float32)
        z = z + b_ref[...]                                # f32 bias add (broadcast row)
        if layer < num_layers - 1:
            h = jnp.maximum(z, 0.0).astype(w_ref.dtype)   # ReLU, back to compute dtype
        else:
            logits = z                                    # final layer: no activation

    # Numerically-stable softmax over the last axis, exact normalization so
    # per-row probabilities sum to 1 to f32 rounding (log-prob / entropy safe).
    m = jnp.max(logits, axis=-1, keepdims=True)
    e = jnp.exp(logits - m)
    denom = jnp.sum(e, axis=-1, keepdims=True)
    out_ref[...] = (e / denom).astype(out_ref.dtype)


@functools.partial(jax.jit, static_argnames=("tile_b", "use_bf16"))
def mlp_discrete_policy(x, weights, biases, *, tile_b=1024, use_bf16=False):
    """x: (B, D_in) f32; weights[i]: (in_i, out_i); biases[i]: (out_i,).

    Returns softmax action probabilities (B, D_out) in f32.
    """
    B, D_in = x.shape
    num_layers = len(weights)
    D_out = weights[-1].shape[1]

    # --- batch tiling: multiple of 8; >=2 tiles for large batches (v7x) ------
    tile_b = max(8, _round_up(min(int(tile_b), B), 8))
    if B > 256 and B <= tile_b:
        # Split a large single-tile batch in two so megacore sharding engages.
        tile_b = max(8, _round_up((B + 1) // 2, 8))
    B_p = _round_up(B, tile_b)
    if B_p != B:
        x = jnp.pad(x, ((0, B_p - B), (0, 0)))            # padded rows sliced off below
    grid = (B_p // tile_b,)

    # --- dtype handling: cast ONCE here, not per grid step inside the kernel -
    compute_dtype = jnp.bfloat16 if use_bf16 else jnp.float32
    x = x.astype(compute_dtype)
    weights = tuple(w.astype(compute_dtype) for w in weights)
    biases = tuple(b.astype(jnp.float32).reshape(1, -1) for b in biases)

    # --- specs: x/out pipelined over batch, params VMEM-resident, 1 buffer ---
    resident = dict(pipeline_mode=pl.Buffered(1))
    in_specs = [pl.BlockSpec((tile_b, D_in), lambda i: (i, 0))]
    flat_params = []
    for w, b in zip(weights, biases):
        in_specs.append(pl.BlockSpec(w.shape, lambda i: (0, 0), **resident))
        in_specs.append(pl.BlockSpec(b.shape, lambda i: (0, 0), **resident))
        flat_params += [w, b]
    out_spec = pl.BlockSpec((tile_b, D_out), lambda i: (i, 0))

    # --- VMEM budget: resident params (1 buf) + double-buffered x/out + temps -
    w_bytes = sum(w.size * w.dtype.itemsize for w in weights)
    b_bytes = sum(b.size * b.dtype.itemsize for b in biases)
    widest = max([D_in] + [w.shape[1] for w in weights])
    stream_bytes = (2 * tile_b * D_in * x.dtype.itemsize   # x, double buffered
                    + 2 * tile_b * D_out * 4               # out, double buffered
                    + 2 * tile_b * widest * 4)             # activation temporaries
    vmem_limit = int(min(max(2 * (w_bytes + b_bytes + stream_bytes), 32 << 20),
                         64 << 20))

    # Advisory cost estimate so XLA schedules the custom call sensibly.
    flops = 2 * B_p * sum(w.shape[0] * w.shape[1] for w in weights)
    bytes_accessed = (B_p * D_in * x.dtype.itemsize + w_bytes + b_bytes
                      + B_p * D_out * 4)
    cost = pl.CostEstimate(flops=flops, transcendentals=B_p * D_out,
                           bytes_accessed=bytes_accessed)

    out = pl.pallas_call(
        functools.partial(_mlp_policy_kernel, num_layers=num_layers),
        out_shape=jax.ShapeDtypeStruct((B_p, D_out), jnp.float32),
        grid=grid,
        in_specs=in_specs,
        out_specs=out_spec,
        compiler_params=pltpu.CompilerParams(
            dimension_semantics=("parallel",),   # batch tiles independent (megacore)
            vmem_limit_bytes=vmem_limit,
        ),
        cost_estimate=cost,
    )(x, *flat_params)

    return out[:B] if B_p != B else out


def init_params(key, input_dim, hidden_dims, output_dim):
    """PyTorch nn.Linear-like uniform(+-1/sqrt(fan_in)) init; weights as (in, out)."""
    dims = (input_dim,) + tuple(hidden_dims) + (output_dim,)
    weights, biases = [], []
    for fan_in, fan_out in zip(dims[:-1], dims[1:]):
        key, kw, kb = jax.random.split(key, 3)
        bound = 1.0 / float(fan_in) ** 0.5
        weights.append(
            jax.random.uniform(kw, (fan_in, fan_out), jnp.float32, -bound, bound))
        biases.append(
            jax.random.uniform(kb, (fan_out,), jnp.float32, -bound, bound))
    return tuple(weights), tuple(biases)


if __name__ == "__main__":
    # MLPDiscretePolicy(input_dim=32, output_dim=16, hidden_dims=(128,)), batch of 8.
    # TODO(synk): the PyTorch _format() numpy->tensor conversion is host-side and has
    # no kernel equivalent; callers pass jnp arrays directly.
    batch, input_dim, hidden_dims, output_dim = 8, 32, (128,), 16

    key = jax.random.PRNGKey(0)
    kx, kp = jax.random.split(key)
    x = jax.random.normal(kx, (batch, input_dim), jnp.float32)
    weights, biases = init_params(kp, input_dim, hidden_dims, output_dim)

    probs = mlp_discrete_policy(x, weights, biases)
    probs = jax.block_until_ready(probs)

    # Pure-JAX f32 reference.
    h = x
    for w, b in zip(weights[:-1], biases[:-1]):
        h = jnp.maximum(h @ w + b, 0.0)
    ref = jax.nn.softmax(h @ weights[-1] + biases[-1], axis=-1)

    assert probs.shape == (batch, output_dim)
    assert jnp.allclose(probs, ref, atol=1e-4, rtol=1e-4), "mismatch vs reference"
    assert jnp.allclose(jnp.sum(probs, axis=-1), 1.0, atol=1e-4), "rows must sum to 1"

    print("KERNEL_OK")
</pallas_src>

<mosaic_0001>
module attributes {stable_mosaic.version = 11 : i64} {
  func.func @_mlp_policy_kernel(%arg0: i32, %arg1: memref<8x32xf32, #tpu.memory_space<vmem>>, %arg2: memref<32x128xf32, #tpu.memory_space<vmem>>, %arg3: memref<1x128xf32, #tpu.memory_space<vmem>>, %arg4: memref<128x16xf32, #tpu.memory_space<vmem>>, %arg5: memref<1x16xf32, #tpu.memory_space<vmem>>, %arg6: memref<8x16xf32, #tpu.memory_space<vmem>>) attributes {dimension_semantics = [#tpu.dimension_semantics<parallel>], iteration_bounds = array<i64: 1>, scalar_prefetch = 0 : i64, scratch_operands = 0 : i64, tpu.core_type = #tpu.core_type<tc>, window_params = [{transform_indices = @transform_0, window_bounds = array<i64: 8, 32>}, {pipeline_mode = #tpu.pipeline_mode<synchronous>, transform_indices = @transform_1, window_bounds = array<i64: 32, 128>}, {pipeline_mode = #tpu.pipeline_mode<synchronous>, transform_indices = @transform_2, window_bounds = array<i64: 1, 128>}, {pipeline_mode = #tpu.pipeline_mode<synchronous>, transform_indices = @transform_3, window_bounds = array<i64: 128, 16>}, {pipeline_mode = #tpu.pipeline_mode<synchronous>, transform_indices = @transform_4, window_bounds = array<i64: 1, 16>}, {transform_indices = @transform_5, window_bounds = array<i64: 8, 16>}]} {
    %c0 = arith.constant 0 : index
    %c0_0 = arith.constant 0 : index
    %0 = vector.load %arg1[%c0, %c0_0] : memref<8x32xf32, #tpu.memory_space<vmem>>, vector<8x32xf32>
    %c0_1 = arith.constant 0 : index
    %c0_2 = arith.constant 0 : index
    %1 = vector.load %arg2[%c0_1, %c0_2] : memref<32x128xf32, #tpu.memory_space<vmem>>, vector<32x128xf32>
    %cst = arith.constant dense<0.000000e+00> : vector<8x128xf32>
    %2 = tpu.matmul %0, %1, %cst {dimension_numbers = #tpu.dot_dimension_numbers<[1], [0], [0], [1], [0, 0, 1, 1], [], []>} : vector<8x32xf32>, vector<32x128xf32>, vector<8x128xf32> -> vector<8x128xf32>
    %c0_3 = arith.constant 0 : index
    %c0_4 = arith.constant 0 : index
    %3 = vector.load %arg3[%c0_3, %c0_4] : memref<1x128xf32, #tpu.memory_space<vmem>>, vector<1x128xf32>
    %4 = vector.broadcast %3 : vector<1x128xf32> to vector<8x128xf32>
    %5 = arith.addf %2, %4 : vector<8x128xf32>
    %cst_5 = arith.constant 0.000000e+00 : f32
    %6 = vector.broadcast %cst_5 : f32 to vector<8x128xf32>
    %7 = arith.maximumf %5, %6 : vector<8x128xf32>
    %c0_6 = arith.constant 0 : index
    %c0_7 = arith.constant 0 : index
    %8 = vector.load %arg4[%c0_6, %c0_7] : memref<128x16xf32, #tpu.memory_space<vmem>>, vector<128x16xf32>
    %cst_8 = arith.constant dense<0.000000e+00> : vector<8x16xf32>
    %9 = tpu.matmul %7, %8, %cst_8 {dimension_numbers = #tpu.dot_dimension_numbers<[1], [0], [0], [1], [0, 0, 1, 1], [], []>} : vector<8x128xf32>, vector<128x16xf32>, vector<8x16xf32> -> vector<8x16xf32>
    %c0_9 = arith.constant 0 : index
    %c0_10 = arith.constant 0 : index
    %10 = vector.load %arg5[%c0_9, %c0_10] : memref<1x16xf32, #tpu.memory_space<vmem>>, vector<1x16xf32>
    %11 = vector.broadcast %10 : vector<1x16xf32> to vector<8x16xf32>
    %12 = arith.addf %9, %11 : vector<8x16xf32>
    %cst_11 = arith.constant dense<0xFF800000> : vector<8xf32>
    %13 = vector.multi_reduction <maximumf>, %12, %cst_11 [1] : vector<8x16xf32> to vector<8xf32>
    %14 = vector.shape_cast %13 : vector<8xf32> to vector<8x1xf32>
    %15 = vector.broadcast %14 : vector<8x1xf32> to vector<8x16xf32>
    %16 = arith.subf %12, %15 : vector<8x16xf32>
    %17 = math.exp %16 : vector<8x16xf32>
    %cst_12 = arith.constant dense<0.000000e+00> : vector<8xf32>
    %18 = vector.multi_reduction <add>, %17, %cst_12 [1] : vector<8x16xf32> to vector<8xf32>
    %19 = vector.shape_cast %18 : vector<8xf32> to vector<8x1xf32>
    %20 = vector.broadcast %19 : vector<8x1xf32> to vector<8x16xf32>
    %21 = arith.divf %17, %20 : vector<8x16xf32>
    %c0_13 = arith.constant 0 : index
    %c0_14 = arith.constant 0 : index
    %22 = vector.load %arg6[%c0_13, %c0_14] : memref<8x16xf32, #tpu.memory_space<vmem>>, vector<8x16xf32>
    tpu.vector_store %arg6[%c0_13, %c0_14], %21 {strides = array<i32>} : memref<8x16xf32, #tpu.memory_space<vmem>>, vector<8x16xf32>,
    return
  }
  func.func @transform_0(%arg0: i32) -> (i32, i32) {
    %c0_i32 = arith.constant 0 : i32
    %c0_i32_0 = arith.constant 0 : i32
    return %arg0, %c0_i32 : i32, i32
  }
  func.func @transform_1(%arg0: i32) -> (i32, i32) {
    %c0_i32 = arith.constant 0 : i32
    %c0_i32_0 = arith.constant 0 : i32
    %c0_i32_1 = arith.constant 0 : i32
    return %c0_i32, %c0_i32_0 : i32, i32
  }
  func.func @transform_2(%arg0: i32) -> (i32, i32) {
    %c0_i32 = arith.constant 0 : i32
    %c0_i32_0 = arith.constant 0 : i32
    %c0_i32_1 = arith.constant 0 : i32
    return %c0_i32, %c0_i32_0 : i32, i32
  }
  func.func @transform_3(%arg0: i32) -> (i32, i32) {
    %c0_i32 = arith.constant 0 : i32
    %c0_i32_0 = arith.constant 0 : i32
    %c0_i32_1 = arith.constant 0 : i32
    return %c0_i32, %c0_i32_0 : i32, i32
  }
  func.func @transform_4(%arg0: i32) -> (i32, i32) {
    %c0_i32 = arith.constant 0 : i32
    %c0_i32_0 = arith.constant 0 : i32
    %c0_i32_1 = arith.constant 0 : i32
    return %c0_i32, %c0_i32_0 : i32, i32
  }
  func.func @transform_5(%arg0: i32) -> (i32, i32) {
    %c0_i32 = arith.constant 0 : i32
    %c0_i32_0 = arith.constant 0 : i32
    return %arg0, %c0_i32 : i32, i32
  }
}

</mosaic_0001>

<llo_original>
// kernel: mlp_discrete_policy.1
$region0: #{mlp_discrete_policy.1}
  #allocation0 [shape = 'u32[]', space=smem, size = 0x4, offset = 0x4, fixed_abs, tag = 'smem constant byte address 0x4 - core index']
  #allocation1 [shape = 'u32[144,128]{1,0:T(1,128)}', space=vmem, size = 0x12000, scoped, tag = 'internal scratch']
  %s0 = inlined_call_operand.vmem [shape: f32[8,32], index: 0, kind: input, shape index: {}]
  %s1 = inlined_call_operand.vmem [shape: f32[32,128], index: 1, kind: input, shape index: {}]
  %s2 = inlined_call_operand.vmem [shape: f32[1,128], index: 2, kind: input, shape index: {}]
  %s3 = inlined_call_operand.vmem [shape: f32[128,16], index: 3, kind: input, shape index: {}]
  %s4 = inlined_call_operand.vmem [shape: f32[1,16], index: 4, kind: input, shape index: {}]
  %s5 = inlined_call_operand.hbm [shape: f32[8,16], index: 5, kind: output, shape index: {}]
  %s6 = sld [smem:[#allocation0]]
  $region30: #{mlp_discrete_policy.1} parent=0
    _
  %s8 = ssub.s32 1, %s6
  %s9 = scalar_select 0, %s8, %s6
  $region1: #{mlp_discrete_policy.1} parent=0
    #allocation2 [shape = 'u8[4096]{0}', space=vmem, size = 0x1000, scoped, tag = 'output window, operand 0, single buffered']
    #allocation3 [shape = 's32[1]{0}', space=sflag, size = 0x4, scoped, tag = 'scoped memory for mlp_discrete_policy.1']
    %10 = vsyncpa [#allocation3], 0
    // Predicated region
    $region2: #{mlp_discrete_policy.1} parent=1 // pred_check
      _
    $region3: #{mlp_discrete_policy.1} parent=1 // pred_check_branch
      %12 = sbr.rel (0) target = $region5
    $region4: #{mlp_discrete_policy.1} parent=1 // pred_region
      _
    $region5: #{mlp_discrete_policy.1} parent=1 // pred_fallthru
      _
    // Predicated region
    $region6: #{mlp_discrete_policy.1} parent=1 // pred_check
      _
    $region7: #{mlp_discrete_policy.1} parent=1 // pred_check_branch
      %14 = sbr.rel (0) target = $region9
    $region8: #{mlp_discrete_policy.1} parent=1 // pred_region
      _
    $region9: #{mlp_discrete_policy.1} parent=1 // pred_fallthru
      _
    // Predicated region
    $region10: #{mlp_discrete_policy.1} parent=1 // pred_check
      _
    $region11: #{mlp_discrete_policy.1} parent=1 // pred_check_branch
      %16 = sbr.rel (0) target = $region13
    $region12: #{mlp_discrete_policy.1} parent=1 // pred_region
      _
    $region13: #{mlp_discrete_policy.1} parent=1 // pred_fallthru
      _
    // Predicated region
    $region14: #{mlp_discrete_policy.1} parent=1 // pred_check
      _
    $region15: #{mlp_discrete_policy.1} parent=1 // pred_check_branch
      %18 = sbr.rel (0) target = $region17
    $region16: #{mlp_discrete_policy.1} parent=1 // pred_region
      _
    $region17: #{mlp_discrete_policy.1} parent=1 // pred_fallthru
      _
    // Predicated region
    $region18: #{mlp_discrete_policy.1} parent=1 // pred_check
      _
    $region19: #{mlp_discrete_policy.1} parent=1 // pred_check_branch
      %20 = sbr.rel (0) target = $region21
    $region20: #{mlp_discrete_policy.1} parent=1 // pred_region
      _
    $region21: #{mlp_discrete_policy.1} parent=1 // pred_fallthru
      _
    %v21 = vld [vmem:[%s0] sm:$0xff]
    %v22 = vld [vmem:[%s1] sm:$0xff]
    %v23 = vld [vmem:[%s1 + $0x8] sm:$0xff]
    %v24 = vld [vmem:[%s1 + $0x10] sm:$0xff]
    %v25 = vld [vmem:[%s1 + $0x18] sm:$0xff]
    %v26 = vld [vmem:[%s2] sm:$0x1]
    %v28 = vlaneseq
    %v29 = vshrl.u32 %v28, 7
    %v30 = vsub.s32 0, %v29
    %v31 = vrot.slane %v26, %v30
    %vm33 = vcmask 261120
    %v35 = vsel %vm33, %v21, 0
    %37 = vmatprep.subr.mxu0 0.0
    %38 = vmatpush1.msra.mxu0 %v22
    %39 = vmatprep.subr.mxu0 0.0
    %40 = vmatpush1.msra.mxu0 %v23
    %41 = vmatprep.subr.mxu0 0.0
    %42 = vmatpush1.msra.mxu0 %v24
    %43 = vmatprep.subr.mxu0 0.0
    %44 = vmatpush1.msra.mxu0 %v25
    %45 = vmatprep.subr.mxu0 0.0
    %46 = vmatpush1.msra.mxu0 0.0
    %47 = vmatprep.subr.mxu0 0.0
    %48 = vmatpush1.msra.mxu0 0.0
    %49 = vmatprep.subr.mxu0 0.0
    %50 = vmatpush1.msra.mxu0 0.0
    %51 = vmatprep.subr.mxu0 0.0
    %52 = vmatpush1.msra.mxu0 0.0
    %53 = vmatprep.subr.mxu0 0.0
    %54 = vmatpush1.msra.mxu0 0.0
    %55 = vmatprep.subr.mxu0 0.0
    %56 = vmatpush1.msra.mxu0 0.0
    %57 = vmatprep.subr.mxu0 0.0
    %58 = vmatpush1.msra.mxu0 0.0
    %59 = vmatprep.subr.mxu0 0.0
    %60 = vmatpush1.msra.mxu0 0.0
    %61 = vmatprep.subr.mxu0 0.0
    %62 = vmatpush1.msra.mxu0 0.0
    %63 = vmatprep.subr.mxu0 0.0
    %64 = vmatpush1.msra.mxu0 0.0
    %65 = vmatprep.subr.mxu0 0.0
    %66 = vmatpush1.msra.mxu0 0.0
    %67 = vmatprep.subr.mxu0 0.0
    %68 = vmatpush1.msra.mxu0 0.0
    %69 = vmatprep.subr.mxu0 0.0
    %70 = vmatpush1.msra.mxu0 0.0
    %71 = vmatprep.subr.mxu0 0.0
    %72 = vmatpush1.msra.mxu0 0.0
    %73 = vmatprep.subr.mxu0 0.0
    %74 = vmatpush1.msra.mxu0 0.0
    %75 = vmatprep.subr.mxu0 0.0
    %76 = vmatpush1.msra.mxu0 0.0
    %77 = vmatprep.subr.mxu0 0.0
    %78 = vmatpush1.msra.mxu0 0.0
    %79 = vmatprep.subr.mxu0 0.0
    %80 = vmatpush1.msra.mxu0 0.0
    %81 = vmatprep.subr.mxu0 0.0
    %82 = vmatpush1.msra.mxu0 0.0
    %83 = vmatprep.subr.mxu0 0.0
    %84 = vmatpush1.msra.mxu0 0.0
    %85 = vmatprep.subr.mxu0 0.0
    %86 = vmatpush1.msra.mxu0 0.0
    %87 = vmatprep.subr.mxu0 0.0
    %88 = vmatpush1.msra.mxu0 0.0
    %89 = vmatprep.subr.mxu0 0.0
    %90 = vmatpush1.msra.mxu0 0.0
    %91 = vmatprep.subr.mxu0 0.0
    %92 = vmatpush1.msra.mxu0 0.0
    %93 = vmatprep.subr.mxu0 0.0
    %94 = vmatpush1.msra.mxu0 0.0
    %95 = vmatprep.subr.mxu0 0.0
    %96 = vmatpush1.msra.mxu0 0.0
    %97 = vmatprep.subr.mxu0 0.0
    %98 = vmatpush1.msra.mxu0 0.0
    %99 = vmatprep.subr.mxu0 0.0
    %100 = vmatpush1.msra.mxu0 0.0
    %101 = vmatprep.mubr.f32.mxu0 0.0
    %102 = vmatmul.mubr.f32.gmra.mrb[0].mxu0 %v35
    %v103 = vpop.f32.mrb[0].mxu0
    %v104 = vadd.f32 %v31, %v103
    %v105 = vpop.f32.mrb[0].mxu0
    %106 = vdwg.mxu0
    %v107 = vmax.f32 %v104, 0.0
    %v108 = vld [vmem:[%s3] sm:$0xff]
    %v109 = vld [vmem:[%s3 + $0x8] sm:$0xff]
    %v110 = vld [vmem:[%s3 + $0x10] sm:$0xff]
    %v111 = vld [vmem:[%s3 + $0x18] sm:$0xff]
    %v112 = vld [vmem:[%s3 + $0x20] sm:$0xff]
    %v113 = vld [vmem:[%s3 + $0x28] sm:$0xff]
    %v114 = vld [vmem:[%s3 + $0x30] sm:$0xff]
    %v115 = vld [vmem:[%s3 + $0x38] sm:$0xff]
    %v116 = vld [vmem:[%s3 + $0x40] sm:$0xff]
    %v117 = vld [vmem:[%s3 + $0x48] sm:$0xff]
    %v118 = vld [vmem:[%s3 + $0x50] sm:$0xff]
    %v119 = vld [vmem:[%s3 + $0x58] sm:$0xff]
    %v120 = vld [vmem:[%s3 + $0x60] sm:$0xff]
    %v121 = vld [vmem:[%s3 + $0x68] sm:$0xff]
    %v122 = vld [vmem:[%s3 + $0x70] sm:$0xff]
    %v123 = vld [vmem:[%s3 + $0x78] sm:$0xff]
    %v124 = vld [vmem:[%s4] sm:$0x1]
    %v126 = vlaneseq
    %v127 = vshrl.u32 %v126, 7
    %v128 = vsub.s32 0, %v127
    %v129 = vrot.slane %v124, %v128
    %131 = vmatprep.subr.mxu0 0.0
    %132 = vmatpush1.msra.mxu0 %v108
    %133 = vmatprep.subr.mxu0 0.0
    %134 = vmatpush1.msra.mxu0 %v109
    %135 = vmatprep.subr.mxu0 0.0
    %136 = vmatpush1.msra.mxu0 %v110
    %137 = vmatprep.subr.mxu0 0.0
    %138 = vmatpush1.msra.mxu0 %v111
    %139 = vmatprep.subr.mxu0 0.0
    %140 = vmatpush1.msra.mxu0 %v112
    %141 = vmatprep.subr.mxu0 0.0
    %142 = vmatpush1.msra.mxu0 %v113
    %143 = vmatprep.subr.mxu0 0.0
    %144 = vmatpush1.msra.mxu0 %v114
    %145 = vmatprep.subr.mxu0 0.0
    %146 = vmatpush1.msra.mxu0 %v115
    %147 = vmatprep.subr.mxu0 0.0
    %148 = vmatpush1.msra.mxu0 %v116
    %149 = vmatprep.subr.mxu0 0.0
    %150 = vmatpush1.msra.mxu0 %v117
    %151 = vmatprep.subr.mxu0 0.0
    %152 = vmatpush1.msra.mxu0 %v118
    %153 = vmatprep.subr.mxu0 0.0
    %154 = vmatpush1.msra.mxu0 %v119
    %155 = vmatprep.subr.mxu0 0.0
    %156 = vmatpush1.msra.mxu0 %v120
    %157 = vmatprep.subr.mxu0 0.0
    %158 = vmatpush1.msra.mxu0 %v121
    %159 = vmatprep.subr.mxu0 0.0
    %160 = vmatpush1.msra.mxu0 %v122
    %161 = vmatprep.subr.mxu0 0.0
    %162 = vmatpush1.msra.mxu0 %v123
    %163 = vmatprep.subr.mxu0 0.0
    %164 = vmatpush1.msra.mxu0 0.0
    %165 = vmatprep.subr.mxu0 0.0
    %166 = vmatpush1.msra.mxu0 0.0
    %167 = vmatprep.subr.mxu0 0.0
    %168 = vmatpush1.msra.mxu0 0.0
    %169 = vmatprep.subr.mxu0 0.0
    %170 = vmatpush1.msra.mxu0 0.0
    %171 = vmatprep.subr.mxu0 0.0
    %172 = vmatpush1.msra.mxu0 0.0
    %173 = vmatprep.subr.mxu0 0.0
    %174 = vmatpush1.msra.mxu0 0.0
    %175 = vmatprep.subr.mxu0 0.0
    %176 = vmatpush1.msra.mxu0 0.0
    %177 = vmatprep.subr.mxu0 0.0
    %178 = vmatpush1.msra.mxu0 0.0
    %179 = vmatprep.subr.mxu0 0.0
    %180 = vmatpush1.msra.mxu0 0.0
    %181 = vmatprep.subr.mxu0 0.0
    %182 = vmatpush1.msra.mxu0 0.0
    %183 = vmatprep.subr.mxu0 0.0
    %184 = vmatpush1.msra.mxu0 0.0
    %185 = vmatprep.subr.mxu0 0.0
    %186 = vmatpush1.msra.mxu0 0.0
    %187 = vmatprep.subr.mxu0 0.0
    %188 = vmatpush1.msra.mxu0 0.0
    %189 = vmatprep.subr.mxu0 0.0
    %190 = vmatpush1.msra.mxu0 0.0
    %191 = vmatprep.subr.mxu0 0.0
    %192 = vmatpush1.msra.mxu0 0.0
    %193 = vmatprep.subr.mxu0 0.0
    %194 = vmatpush1.msra.mxu0 0.0
    %195 = vmatprep.mubr.f32.mxu0 0.0
    %196 = vmatmul.mubr.f32.gmra.mrb[0].mxu0 %v107
    %v197 = vpop.f32.mrb[0].mxu0
    %v198 = vadd.f32 %v129, %v197
    %v199 = vpop.f32.mrb[0].mxu0
    %200 = vdwg.mxu0
    %vm201 = vcmask 130048
    %v202 = vsel %vm201, %v198, -inf
    %203 = vmax.xlane.f32.xlu0 %v202
    %v204 = vpop.xlane.xlu0 %203
    %v205 = vsub.f32 %v198, %v204
    %v206 = vmul.f32 %v205, 1.442695
    %v207 = vpow.pop %v206
    %v208 = vsel %vm201, %v207, 0.0
    %209 = vadd.xlane.f32.xlu0 %v208
    %v210 = vpop.xlane.xlu0 %209
    %v211 = vrcp.pop %v210
    %v212 = vmul.f32 %v207, %v211
    %213 = vst.msk [vmem:[#allocation2] sm:$0xff] %vm201, %v212
    // Predicated region
    $region22: #{mlp_discrete_policy.1} parent=1 // pred_check
      _
    $region23: #{mlp_discrete_policy.1} parent=1 // pred_check_branch
      %215 = sbr.rel (0) target = $region25
    $region24: #{mlp_discrete_policy.1} parent=1 // pred_region
      %s217 = ssub.s32 128, 128
      %218 = vsyncadd [#allocation3], %s217
      %s220 = sshll.u32 [#allocation2], 4
      %s221 = int_to_ptr.vmem [resolvable:$true] %s220
      %223 = dma.vmem_to_hbm [thread:$0]  %s221, 128, %s5, [#allocation3]
    $region25: #{mlp_discrete_policy.1} parent=1 // pred_fallthru
      _
    // Predicated region
    $region26: #{mlp_discrete_policy.1} parent=1 // pred_check
      _
    $region27: #{mlp_discrete_policy.1} parent=1 // pred_check_branch
      %225 = sbr.rel (0) target = $region29
    $region28: #{mlp_discrete_policy.1} parent=1 // pred_region
      %226 = dma.done [#allocation3], 128
    $region29: #{mlp_discrete_policy.1} parent=1 // pred_fallthru
      _
    %227 = vsyncpa [#allocation3], 1

</llo_original>
